<compile_context>
chip_gen: v7x
topology: tpu7x:2x2x1
jax: 0.10.0
libtpu: 0.0.40
codegen_flags: <defaults>
</compile_context>

<pallas_src>
import jax
import jax.numpy as jnp
from jax import lax
from jax.experimental import pallas as pl
from jax.experimental.pallas import tpu as pltpu


def _round_up(x, k):
    return (x + k - 1) // k * k


def _em_block_kernel(l_ref, dw_ref, g_ref, out_ref, carry_ref):
    """One (batch-chunk, time-chunk) tile of the Euler–Maruyama recurrence.

    l_ref    : (tb, tb)    lower-triangular ones (resident across the grid)
    dw_ref   : (m, tb, nb) Brownian increments, time on sublanes, N on lanes
    g_ref    : (m, d, nb)  per-sample diffusion matrices (resident per chunk)
    out_ref  : (d, tb, nb) solution slab for this chunk
    carry_ref: (d, 1, nb)  state at the end of the previous time chunk
    """
    ti = pl.program_id(1)
    m, tb, _ = dw_ref.shape
    d = out_ref.shape[0]

    # Fresh time sweep for this batch chunk -> x = xy0 = 0.
    @pl.when(ti == 0)
    def _():
        carry_ref[...] = jnp.zeros_like(carry_ref)

    # Enforce xs[0] == xy0 == 0: the increment attributed to the first global
    # time row never contributes (kernel no longer relies on dW[0] == 0).
    t_local = lax.broadcasted_iota(jnp.int32, (tb, 1), 0)
    keep = ((t_local + ti * tb) > 0).astype(dw_ref.dtype)           # (tb, 1)

    l_mat = l_ref[...]                                               # (tb, tb)
    gv = g_ref[...]                                                  # (m, d, nb)
    dws = [dw_ref[mi] * keep for mi in range(m)]                     # (tb, nb)

    for di in range(d):
        # inc[t, n] = sum_m g[m, di, n] * dW[m, t, n]   (pure VPU mul/add)
        inc = dws[0] * gv[0, di:di + 1, :]
        for mi in range(1, m):
            inc = inc + dws[mi] * gv[mi, di:di + 1, :]
        # Block prefix-sum on the MXU: cs[t] = sum_{s <= t} inc[s].
        cs = jnp.dot(l_mat, inc, preferred_element_type=jnp.float32)
        cs = cs + carry_ref[di]                                      # (1, nb)
        out_ref[di] = cs.astype(out_ref.dtype)
        carry_ref[di] = cs[tb - 1:tb, :]


def brownian_motion_forward(dW, g, *, time_block=256, batch_block=512,
                            out_dtype=None, interpret=False):
    """Pallas BrownianMotion.forward, kernel-native layout.

    dW : (m, T, N) float32 Brownian increments, one per output time point
         (row 0 is ignored: xs[0] == xy0 == 0, as torchsde.sdeint returns).
    g  : (m, d, N) float32 per-sample diffusion matrices.
    Returns xs : (d, T, N) with xs[:, t] = sum_{1 <= s <= t} g @ dW[:, s].
    """
    m, T, N = dW.shape
    m2, d, N2 = g.shape
    assert m2 == m and N2 == N
    out_dtype = dW.dtype if out_dtype is None else jnp.dtype(out_dtype)

    # Time chunk: sublane-aligned; 256 matches v6e/v7x MXU width (use 128 on v5e).
    tb = _round_up(min(time_block, _round_up(T, 8)), 8)
    Tp = _round_up(T, tb)

    # Batch chunk: largest lane-aligned tile <= batch_block; force >= 2 chunks
    # when possible so both v7x TensorCores get work on the parallel axis.
    Np0 = _round_up(N, 128)
    nb = max(128, min(batch_block, Np0) // 128 * 128)
    if Np0 >= 2 * 128 and Np0 // nb < 2:
        nb = max(128, (Np0 // 2) // 128 * 128)
    Np = _round_up(N, nb)

    dW_p, g_p = dW, g
    if Tp != T or Np != N:
        dW_p = jnp.pad(dW, ((0, 0), (0, Tp - T), (0, Np - N)))
    if Np != N:
        g_p = jnp.pad(g, ((0, 0), (0, 0), (0, Np - N)))

    # Lower-triangular ones; exact 0/1, drives the MXU prefix sum.
    L = jnp.tril(jnp.ones((tb, tb), jnp.float32))

    grid = (Np // nb, Tp // tb)

    xs = pl.pallas_call(
        _em_block_kernel,
        out_shape=jax.ShapeDtypeStruct((d, Tp, Np), out_dtype),
        grid_spec=pltpu.PrefetchScalarGridSpec(
            num_scalar_prefetch=0,
            grid=grid,
            in_specs=[
                pl.BlockSpec((tb, tb), lambda ni, ti: (0, 0)),           # L
                pl.BlockSpec((m, tb, nb), lambda ni, ti: (0, ti, ni)),   # dW
                pl.BlockSpec((m, d, nb), lambda ni, ti: (0, 0, ni)),     # g
            ],
            out_specs=pl.BlockSpec((d, tb, nb), lambda ni, ti: (0, ti, ni)),
            scratch_shapes=[pltpu.VMEM((d, 1, nb), jnp.float32)],
        ),
        compiler_params=pltpu.CompilerParams(
            # batch chunks independent (megacore on v7x); time carries state.
            dimension_semantics=("parallel", "arbitrary"),
            vmem_limit_bytes=32 * 1024 * 1024,
        ),
        cost_estimate=pl.CostEstimate(
            flops=2 * d * Tp * Np * (m + tb),
            transcendentals=0,
            bytes_accessed=4 * (m * Tp * Np + m * d * Np + d * Tp * Np),
        ),
        interpret=interpret,
    )(L, dW_p, g_p)

    if Tp != T or Np != N:
        xs = xs[:, :T, :N]
    return xs


def make_diffusion_matrix(N):
    """Module's g(t, x): concat([ones, zeros, ones, zeros], -1).reshape(N, 2, 2)."""
    ones = jnp.ones((N, 1), dtype=jnp.float32)
    zeros = jnp.zeros((N, 1), dtype=jnp.float32)
    return jnp.concatenate([ones, zeros, ones, zeros], axis=-1).reshape(N, 2, 2)


def make_diffusion_matrix_mdn(N):
    """Same diffusion matrix in the kernel-native (m, d, N) layout."""
    return jnp.zeros((2, 2, N), jnp.float32).at[0].set(1.0)


def brownian_motion_forward_tnd(dW_tnm, g_ndm=None, **kwargs):
    """torchsde-style layout: dW (T, N, m) -> xs (T, N, d). Row dW[0] is ignored."""
    T, N, m = dW_tnm.shape
    if g_ndm is None:
        g_ndm = make_diffusion_matrix(N)
    dW = jnp.transpose(dW_tnm, (2, 0, 1))        # (m, T, N)
    g = jnp.transpose(g_ndm, (2, 1, 0))          # (m, d, N)
    xs = brownian_motion_forward(dW, g, **kwargs)
    return jnp.transpose(xs, (1, 2, 0))          # (T, N, d)


if __name__ == "__main__":
    key = jax.random.PRNGKey(0)

    # Small, module-consistent shapes: state dim d = 2, noise dim m = 2.
    m = d = 2
    N = 256          # batch: two 128-lane chunks -> both v7x cores get work
    T = 64           # number of output time points
    t0, t1 = 0.0, 1.0
    dt = (t1 - t0) / (T - 1)

    # Brownian increments directly in the kernel-native (m, T, N) layout
    # (dW_i ~ N(0, dt); the kernel ignores the t = 0 row by construction).
    dW = jnp.sqrt(dt) * jax.random.normal(key, (m, T, N), dtype=jnp.float32)
    g = make_diffusion_matrix_mdn(N)     # module's [[1, 0], [1, 0]] per sample

    xs = jax.block_until_ready(brownian_motion_forward(dW, g))      # (d, T, N)

    # Pure-JAX Euler–Maruyama reference (f == 0, first increment ignored).
    dW_ref = dW.at[:, 0, :].set(0.0)
    ref = jnp.cumsum(jnp.einsum("mdn,mtn->dtn", g, dW_ref), axis=1)
    assert xs.shape == (d, T, N)
    assert jnp.allclose(xs, ref, atol=1e-4, rtol=1e-4), "mismatch vs reference"
    assert jnp.allclose(xs[:, 0, :], 0.0), "xs[0] must equal xy0 = 0"

    # torchsde-layout compatibility path: (T, N, m) -> (T, N, d).
    xs_tnd = jax.block_until_ready(
        brownian_motion_forward_tnd(jnp.transpose(dW, (1, 2, 0))))
    assert xs_tnd.shape == (T, N, d)
    assert jnp.allclose(xs_tnd, jnp.transpose(ref, (1, 2, 0)), atol=1e-4, rtol=1e-4)

    # TODO(synk): torchsde's BrownianInterval adaptive sub-stepping (dt finer
    # than the output spacing) is not modeled; one EM step per output point.
    print("KERNEL_OK")
</pallas_src>

<mosaic_0001>
module attributes {stable_mosaic.version = 11 : i64} {
  func.func @_em_block_kernel(%arg0: i32, %arg1: i32, %arg2: memref<64x64xf32, #tpu.memory_space<vmem>>, %arg3: memref<2x64x128xf32, #tpu.memory_space<vmem>>, %arg4: memref<2x2x128xf32, #tpu.memory_space<vmem>>, %arg5: memref<2x64x128xf32, #tpu.memory_space<vmem>>, %arg6: memref<2x1x128xf32, #tpu.memory_space<vmem>>) attributes {dimension_semantics = [#tpu.dimension_semantics<parallel>, #tpu.dimension_semantics<arbitrary>], iteration_bounds = array<i64: 2, 1>, scalar_prefetch = 0 : i64, scratch_operands = 1 : i64, tpu.core_type = #tpu.core_type<tc>, window_params = [{pipeline_mode = #tpu.pipeline_mode<synchronous>, transform_indices = @transform_0, window_bounds = array<i64: 64, 64>}, {transform_indices = @transform_1, window_bounds = array<i64: 2, 64, 128>}, {transform_indices = @transform_2, window_bounds = array<i64: 2, 2, 128>}, {transform_indices = @transform_3, window_bounds = array<i64: 2, 64, 128>}]} {
    %c0_i32 = arith.constant 0 : i32
    %0 = arith.cmpi eq, %arg1, %c0_i32 : i32
    %1 = arith.extui %0 : i1 to i32
    %c0_i32_0 = arith.constant 0 : i32
    %2 = arith.cmpi ne, %1, %c0_i32_0 : i32
    scf.if %2 {
      %cst_30 = arith.constant 0.000000e+00 : f32
      %63 = vector.broadcast %cst_30 : f32 to vector<2x1x128xf32>
      %c0_31 = arith.constant 0 : index
      %c0_32 = arith.constant 0 : index
      %c0_33 = arith.constant 0 : index
      %64 = vector.load %arg6[%c0_31, %c0_32, %c0_33] : memref<2x1x128xf32, #tpu.memory_space<vmem>>, vector<2x1x128xf32>
      tpu.vector_store %arg6[%c0_31, %c0_32, %c0_33], %63 {strides = array<i32>} : memref<2x1x128xf32, #tpu.memory_space<vmem>>, vector<2x1x128xf32>,
    } else {
    }
    %3 = tpu.iota {dimensions = array<i32: 0>} : vector<64x1xi32>
    %c64_i32 = arith.constant 64 : i32
    %4 = arith.muli %arg1, %c64_i32 : i32
    %5 = vector.broadcast %4 : i32 to vector<64x1xi32>
    %6 = arith.addi %3, %5 : vector<64x1xi32>
    %c0_i32_1 = arith.constant 0 : i32
    %7 = vector.broadcast %c0_i32_1 : i32 to vector<64x1xi32>
    %8 = arith.cmpi sgt, %6, %7 : vector<64x1xi32>
    %9 = arith.extui %8 : vector<64x1xi1> to vector<64x1xi32>
    %10 = arith.sitofp %9 : vector<64x1xi32> to vector<64x1xf32>
    %c0 = arith.constant 0 : index
    %c0_2 = arith.constant 0 : index
    %11 = vector.load %arg2[%c0, %c0_2] : memref<64x64xf32, #tpu.memory_space<vmem>>, vector<64x64xf32>
    %c0_3 = arith.constant 0 : index
    %c0_4 = arith.constant 0 : index
    %c0_5 = arith.constant 0 : index
    %12 = vector.load %arg4[%c0_3, %c0_4, %c0_5] : memref<2x2x128xf32, #tpu.memory_space<vmem>>, vector<2x2x128xf32>
    %c0_6 = arith.constant 0 : index
    %c0_7 = arith.constant 0 : index
    %c0_8 = arith.constant 0 : index
    %13 = vector.load %arg3[%c0_6, %c0_7, %c0_8] : memref<2x64x128xf32, #tpu.memory_space<vmem>>, vector<1x64x128xf32>
    %14 = vector.shape_cast %13 : vector<1x64x128xf32> to vector<64x128xf32>
    %15 = vector.broadcast %10 : vector<64x1xf32> to vector<64x128xf32>
    %16 = arith.mulf %14, %15 : vector<64x128xf32>
    %c1 = arith.constant 1 : index
    %c0_9 = arith.constant 0 : index
    %c0_10 = arith.constant 0 : index
    %17 = vector.load %arg3[%c1, %c0_9, %c0_10] : memref<2x64x128xf32, #tpu.memory_space<vmem>>, vector<1x64x128xf32>
    %18 = vector.shape_cast %17 : vector<1x64x128xf32> to vector<64x128xf32>
    %19 = vector.broadcast %10 : vector<64x1xf32> to vector<64x128xf32>
    %20 = arith.mulf %18, %19 : vector<64x128xf32>
    %21 = vector.extract_strided_slice %12 {offsets = [0, 0, 0], sizes = [1, 1, 128], strides = [1, 1, 1]} : vector<2x2x128xf32> to vector<1x1x128xf32>
    %22 = vector.shape_cast %21 : vector<1x1x128xf32> to vector<1x128xf32>
    %23 = vector.broadcast %22 : vector<1x128xf32> to vector<64x128xf32>
    %24 = arith.mulf %16, %23 : vector<64x128xf32>
    %25 = vector.extract_strided_slice %12 {offsets = [1, 0, 0], sizes = [1, 1, 128], strides = [1, 1, 1]} : vector<2x2x128xf32> to vector<1x1x128xf32>
    %26 = vector.shape_cast %25 : vector<1x1x128xf32> to vector<1x128xf32>
    %27 = vector.broadcast %26 : vector<1x128xf32> to vector<64x128xf32>
    %28 = arith.mulf %20, %27 : vector<64x128xf32>
    %29 = arith.addf %24, %28 : vector<64x128xf32>
    %cst = arith.constant dense<0.000000e+00> : vector<64x128xf32>
    %30 = tpu.matmul %11, %29, %cst {dimension_numbers = #tpu.dot_dimension_numbers<[1], [0], [0], [1], [0, 0, 1, 1], [], []>} : vector<64x64xf32>, vector<64x128xf32>, vector<64x128xf32> -> vector<64x128xf32>
    %c0_11 = arith.constant 0 : index
    %c0_12 = arith.constant 0 : index
    %c0_13 = arith.constant 0 : index
    %31 = vector.load %arg6[%c0_11, %c0_12, %c0_13] : memref<2x1x128xf32, #tpu.memory_space<vmem>>, vector<1x1x128xf32>
    %32 = vector.shape_cast %31 : vector<1x1x128xf32> to vector<1x128xf32>
    %33 = vector.broadcast %32 : vector<1x128xf32> to vector<64x128xf32>
    %34 = arith.addf %30, %33 : vector<64x128xf32>
    %c0_14 = arith.constant 0 : index
    %c0_15 = arith.constant 0 : index
    %c0_16 = arith.constant 0 : index
    %35 = vector.load %arg5[%c0_14, %c0_15, %c0_16] : memref<2x64x128xf32, #tpu.memory_space<vmem>>, vector<1x64x128xf32>
    %36 = vector.shape_cast %35 : vector<1x64x128xf32> to vector<64x128xf32>
    %37 = vector.shape_cast %34 : vector<64x128xf32> to vector<1x64x128xf32>
    tpu.vector_store %arg5[%c0_14, %c0_15, %c0_16], %37 {strides = array<i32>} : memref<2x64x128xf32, #tpu.memory_space<vmem>>, vector<1x64x128xf32>,
    %38 = vector.extract_strided_slice %34 {offsets = [63, 0], sizes = [1, 128], strides = [1, 1]} : vector<64x128xf32> to vector<1x128xf32>
    %c0_17 = arith.constant 0 : index
    %c0_18 = arith.constant 0 : index
    %c0_19 = arith.constant 0 : index
    %39 = vector.load %arg6[%c0_17, %c0_18, %c0_19] : memref<2x1x128xf32, #tpu.memory_space<vmem>>, vector<1x1x128xf32>
    %40 = vector.shape_cast %39 : vector<1x1x128xf32> to vector<1x128xf32>
    %41 = vector.shape_cast %38 : vector<1x128xf32> to vector<1x1x128xf32>
    tpu.vector_store %arg6[%c0_17, %c0_18, %c0_19], %41 {strides = array<i32>} : memref<2x1x128xf32, #tpu.memory_space<vmem>>, vector<1x1x128xf32>,
    %42 = vector.extract_strided_slice %12 {offsets = [0, 1, 0], sizes = [1, 1, 128], strides = [1, 1, 1]} : vector<2x2x128xf32> to vector<1x1x128xf32>
    %43 = vector.shape_cast %42 : vector<1x1x128xf32> to vector<1x128xf32>
    %44 = vector.broadcast %43 : vector<1x128xf32> to vector<64x128xf32>
    %45 = arith.mulf %16, %44 : vector<64x128xf32>
    %46 = vector.extract_strided_slice %12 {offsets = [1, 1, 0], sizes = [1, 1, 128], strides = [1, 1, 1]} : vector<2x2x128xf32> to vector<1x1x128xf32>
    %47 = vector.shape_cast %46 : vector<1x1x128xf32> to vector<1x128xf32>
    %48 = vector.broadcast %47 : vector<1x128xf32> to vector<64x128xf32>
    %49 = arith.mulf %20, %48 : vector<64x128xf32>
    %50 = arith.addf %45, %49 : vector<64x128xf32>
    %cst_20 = arith.constant dense<0.000000e+00> : vector<64x128xf32>
    %51 = tpu.matmul %11, %50, %cst_20 {dimension_numbers = #tpu.dot_dimension_numbers<[1], [0], [0], [1], [0, 0, 1, 1], [], []>} : vector<64x64xf32>, vector<64x128xf32>, vector<64x128xf32> -> vector<64x128xf32>
    %c1_21 = arith.constant 1 : index
    %c0_22 = arith.constant 0 : index
    %c0_23 = arith.constant 0 : index
    %52 = vector.load %arg6[%c1_21, %c0_22, %c0_23] : memref<2x1x128xf32, #tpu.memory_space<vmem>>, vector<1x1x128xf32>
    %53 = vector.shape_cast %52 : vector<1x1x128xf32> to vector<1x128xf32>
    %54 = vector.broadcast %53 : vector<1x128xf32> to vector<64x128xf32>
    %55 = arith.addf %51, %54 : vector<64x128xf32>
    %c1_24 = arith.constant 1 : index
    %c0_25 = arith.constant 0 : index
    %c0_26 = arith.constant 0 : index
    %56 = vector.load %arg5[%c1_24, %c0_25, %c0_26] : memref<2x64x128xf32, #tpu.memory_space<vmem>>, vector<1x64x128xf32>
    %57 = vector.shape_cast %56 : vector<1x64x128xf32> to vector<64x128xf32>
    %58 = vector.shape_cast %55 : vector<64x128xf32> to vector<1x64x128xf32>
    tpu.vector_store %arg5[%c1_24, %c0_25, %c0_26], %58 {strides = array<i32>} : memref<2x64x128xf32, #tpu.memory_space<vmem>>, vector<1x64x128xf32>,
    %59 = vector.extract_strided_slice %55 {offsets = [63, 0], sizes = [1, 128], strides = [1, 1]} : vector<64x128xf32> to vector<1x128xf32>
    %c1_27 = arith.constant 1 : index
    %c0_28 = arith.constant 0 : index
    %c0_29 = arith.constant 0 : index
    %60 = vector.load %arg6[%c1_27, %c0_28, %c0_29] : memref<2x1x128xf32, #tpu.memory_space<vmem>>, vector<1x1x128xf32>
    %61 = vector.shape_cast %60 : vector<1x1x128xf32> to vector<1x128xf32>
    %62 = vector.shape_cast %59 : vector<1x128xf32> to vector<1x1x128xf32>
    tpu.vector_store %arg6[%c1_27, %c0_28, %c0_29], %62 {strides = array<i32>} : memref<2x1x128xf32, #tpu.memory_space<vmem>>, vector<1x1x128xf32>,
    return
  }
  func.func @transform_0(%arg0: i32, %arg1: i32) -> (i32, i32) {
    %c0_i32 = arith.constant 0 : i32
    %c0_i32_0 = arith.constant 0 : i32
    %c0_i32_1 = arith.constant 0 : i32
    return %c0_i32, %c0_i32_0 : i32, i32
  }
  func.func @transform_1(%arg0: i32, %arg1: i32) -> (i32, i32, i32) {
    %c0_i32 = arith.constant 0 : i32
    %c0_i32_0 = arith.constant 0 : i32
    return %c0_i32, %arg1, %arg0 : i32, i32, i32
  }
  func.func @transform_2(%arg0: i32, %arg1: i32) -> (i32, i32, i32) {
    %c0_i32 = arith.constant 0 : i32
    %c0_i32_0 = arith.constant 0 : i32
    %c0_i32_1 = arith.constant 0 : i32
    return %c0_i32, %c0_i32_0, %arg0 : i32, i32, i32
  }
  func.func @transform_3(%arg0: i32, %arg1: i32) -> (i32, i32, i32) {
    %c0_i32 = arith.constant 0 : i32
    %c0_i32_0 = arith.constant 0 : i32
    return %c0_i32, %arg1, %arg0 : i32, i32, i32
  }
}

</mosaic_0001>

<llo_original>
// kernel: tpu_custom_call.1
$region0: #{tpu_custom_call.1}
  #allocation0 [shape = 'u32[]', space=smem, size = 0x4, offset = 0x4, fixed_abs, tag = 'smem constant byte address 0x4 - core index']
  #allocation1 [shape = 'u32[144,128]{1,0:T(1,128)}', space=vmem, size = 0x12000, scoped, tag = 'internal scratch']
  #allocation2 [shape = 'f32[2,1,128]{2,1,0:T(1,128)}', space=vmem, size = 0x400, scoped, tag = 'scratch operand']
  %s0 = inlined_call_operand.hbm [shape: f32[64,64], index: 0, kind: input, shape index: {}]
  %s1 = inlined_call_operand.hbm [shape: f32[2,64,256], index: 1, kind: input, shape index: {}]
  %s2 = inlined_call_operand.hbm [shape: f32[2,2,256], index: 2, kind: input, shape index: {}]
  %s3 = inlined_call_operand.hbm [shape: f32[2,64,256], index: 3, kind: output, shape index: {}]
  %s4 = sld [smem:[#allocation0]]
  $region61: #{tpu_custom_call.1} parent=0
    _
  %s6 = ssub.s32 1, %s4
  %s7 = scalar_select 0, %s6, %s4
  $region1: #{tpu_custom_call.1} parent=0
    #allocation3 [shape = 'u8[32768]{0}', space=vmem, size = 0x8000, scoped, tag = 'input window, operand 0, single buffered']
    #allocation4 [shape = 's32[2]{0}', space=sflag, size = 0x8, scoped, tag = 'scoped memory for tpu_custom_call.1']
    #allocation5 [shape = 's32[2]{0}', space=sflag, size = 0x8, scoped, tag = 'scoped memory for tpu_custom_call.1']
    #allocation6 [shape = 'u8[131072]{0}', space=vmem, size = 0x20000, scoped, tag = 'input window, operand 1']
    #allocation7 [shape = 's32[2]{0}', space=sflag, size = 0x8, scoped, tag = 'scoped memory for tpu_custom_call.1']
    #allocation8 [shape = 'u8[4096]{0}', space=vmem, size = 0x1000, scoped, tag = 'input window, operand 2']
    #allocation9 [shape = 'u8[131072]{0}', space=vmem, size = 0x20000, scoped, tag = 'output window, operand 0']
    %8 = vsyncpa [#allocation4], 0
    %9 = vsyncpa [#allocation7], 0
    %s10 = scalar_lea.sflag [#allocation7], 1
    %11 = vsyncpa %s10, 0
    %12 = vsyncpa [#allocation5], 0
    %s13 = scalar_lea.sflag [#allocation5], 1
    %14 = vsyncpa %s13, 0
    loop: start=0, step=1, limit=4
    $region2: #{tpu_custom_call.1} parent=1 // loop_pre_header
      _
    $region3: #{tpu_custom_call.1} parent=1 // loop_header
      %s16 = sphi 0, %s20
      %p17 = scmp.ge.s32.totalorder %s16, 4
      %s23 = sphi 0, %s35
      %s24 = sphi 0, %s31
      %s25 = sphi 0, %s23
      %s26 = sphi 0, %s24
      %s27 = sphi 0, %s25
      %s28 = sphi 0, %s26
      %s36 = sphi 0, %s36
      %s38 = sphi 0, %s36
      %s39 = sphi 0, %s38
      %s53 = sphi 0, %s39
      %s61 = sphi 0, %s63
      %s64 = sphi 0, %s61
      %s65 = sphi 0, %s64
      %s81 = sphi 0, %s65
      %s87 = sphi 0, %s89
      %s90 = sphi 0, %s87
      %s91 = sphi 0, %s90
      %s107 = sphi 0, %s91
      %s115 = sphi 0, %s117
      %s118 = sphi 0, %s115
      %s119 = sphi 0, %s118
      %s135 = sphi 0, %s119
    $region4: #{tpu_custom_call.1} parent=1 // loop_header_branch
      %19 = sbr.rel (%p17) target = $region8
    $region5: #{tpu_custom_call.1} parent=1 // loop_body
      %s21 = ssub.s32 %s16, 1
      %s22 = ssub.s32 %s16, 2
      %s29 = sadd.s32 1, %s24
      %p30 = scmp.ge.s32.totalorder %s29, 1
      %s31 = scalar_select %p30, 0, %s29
      %s32 = sadd.s32 1, %s23
      %s33 = scalar_select %p30, %s32, %s23
      %p34 = scmp.ge.s32.totalorder %s33, 2
      %s35 = scalar_select %p34, 0, %s33
      %s37 = sadd.s32 %s36, 1
      %p40 = scmp.eq.s32.totalorder %s16, 1
      %p41 = scmp.ne.s32.totalorder %s36, %s38
      %p42 = scmp.eq.s32.totalorder %s16, 0
      %p43 = por %p41, %p42
      %p44 = scmp.ne.s32.totalorder %s36, %s38
      %p45 = scmp.eq.s32.totalorder %s21, 1
      %p46 = por %p44, %p45
      %p47 = scmp.ne.s32.totalorder %s38, %s39
      %p48 = scmp.eq.s32.totalorder %s21, 0
      %p49 = por %p47, %p48
      %p50 = scmp.ne.s32.totalorder %s38, %s39
      %p51 = scmp.eq.s32.totalorder %s22, 1
      %p52 = por %p50, %p51
      %p54 = scmp.ne.s32.totalorder %s39, %s53
      %p55 = scmp.eq.s32.totalorder %s22, 0
      %p56 = por %p54, %p55
      %s57 = ssub.s32 %s24, %s31
      %s58 = ssub.s32 %s23, %s35
      %s59 = sor.u32 %s57, %s58
      %p60 = scmp.eq.s32.totalorder %s59, 0
      %s62 = sadd.s32 %s61, 1
      %s63 = scalar_select %p60, %s61, %s62
      %p66 = pneg %p60
      %p67 = scmp.eq.s32.totalorder %s16, 1
      %p68 = por %p66, %p67
      %p69 = scmp.ne.s32.totalorder %s61, %s64
      %p70 = scmp.eq.s32.totalorder %s16, 0
      %p71 = por %p69, %p70
      %p72 = scmp.ne.s32.totalorder %s61, %s64
      %p73 = scmp.eq.s32.totalorder %s21, 1
      %p74 = por %p72, %p73
      %p75 = scmp.ne.s32.totalorder %s64, %s65
      %p76 = scmp.eq.s32.totalorder %s21, 0
      %p77 = por %p75, %p76
      %p78 = scmp.ne.s32.totalorder %s64, %s65
      %p79 = scmp.eq.s32.totalorder %s22, 1
      %p80 = por %p78, %p79
      %p82 = scmp.ne.s32.totalorder %s65, %s81
      %p83 = scmp.eq.s32.totalorder %s22, 0
      %p84 = por %p82, %p83
      %s85 = ssub.s32 %s23, %s35
      %p86 = scmp.eq.s32.totalorder %s85, 0
      %s88 = sadd.s32 %s87, 1
      %s89 = scalar_select %p86, %s87, %s88
      %p92 = pneg %p86
      %p93 = scmp.eq.s32.totalorder %s16, 1
      %p94 = por %p92, %p93
      %p95 = scmp.ne.s32.totalorder %s87, %s90
      %p96 = scmp.eq.s32.totalorder %s16, 0
      %p97 = por %p95, %p96
      %p98 = scmp.ne.s32.totalorder %s87, %s90
      %p99 = scmp.eq.s32.totalorder %s21, 1
      %p100 = por %p98, %p99
      %p101 = scmp.ne.s32.totalorder %s90, %s91
      %p102 = scmp.eq.s32.totalorder %s21, 0
      %p103 = por %p101, %p102
      %p104 = scmp.ne.s32.totalorder %s90, %s91
      %p105 = scmp.eq.s32.totalorder %s22, 1
      %p106 = por %p104, %p105
      %p108 = scmp.ne.s32.totalorder %s91, %s107
      %p109 = scmp.eq.s32.totalorder %s22, 0
      %p110 = por %p108, %p109
      %s111 = ssub.s32 %s24, %s31
      %s112 = ssub.s32 %s23, %s35
      %s113 = sor.u32 %s111, %s112
      %p114 = scmp.eq.s32.totalorder %s113, 0
      %s116 = sadd.s32 %s115, 1
      %s117 = scalar_select %p114, %s115, %s116
      %p120 = pneg %p114
      %p121 = scmp.eq.s32.totalorder %s16, 1
      %p122 = por %p120, %p121
      %p123 = scmp.ne.s32.totalorder %s115, %s118
      %p124 = scmp.eq.s32.totalorder %s16, 0
      %p125 = por %p123, %p124
      %p126 = scmp.ne.s32.totalorder %s115, %s118
      %p127 = scmp.eq.s32.totalorder %s21, 1
      %p128 = por %p126, %p127
      %p129 = scmp.ne.s32.totalorder %s118, %s119
      %p130 = scmp.eq.s32.totalorder %s21, 0
      %p131 = por %p129, %p130
      %p132 = scmp.ne.s32.totalorder %s118, %s119
      %p133 = scmp.eq.s32.totalorder %s22, 1
      %p134 = por %p132, %p133
      %p136 = scmp.ne.s32.totalorder %s119, %s135
      %p137 = scmp.eq.s32.totalorder %s22, 0
      %p138 = por %p136, %p137
      %p139 = scmp.le.s32.totalorder 1, %s16
      %p140 = scmp.lt.s32.totalorder %s16, 3
      %p141 = pnand %p139, %p140
      %p142 = pneg %p141
      // Predicated region
      $region9: #{tpu_custom_call.1} parent=5 // pred_check
        _
      $region10: #{tpu_custom_call.1} parent=5 // pred_check_branch
        %144 = sbr.rel (%p141) target = $region12
      $region11: #{tpu_custom_call.1} parent=5 // pred_region
        %s145 = ssub.s32 %s16, 1
        // Predicated region
        $region13: #{tpu_custom_call.1} parent=11 // pred_check
          %p146 = pneg %p49
        $region14: #{tpu_custom_call.1} parent=11 // pred_check_branch
          %148 = sbr.rel (%p146) target = $region16
        $region15: #{tpu_custom_call.1} parent=11 // pred_region
          %s150 = ssub.s32 1024, 1024
          %151 = vsyncadd [#allocation4], %s150
          %s152 = sshll.u32 [#allocation3], 4
          %s153 = int_to_ptr.vmem [resolvable:$true] %s152
          %158 = dma.hbm_to_vmem [thread:$0]  %s0, 1024, %s153, [#allocation4], 128, 128, 8
        $region16: #{tpu_custom_call.1} parent=11 // pred_fallthru
          _
      $region12: #{tpu_custom_call.1} parent=5 // pred_fallthru
        _
      %p159 = scmp.lt.s32.totalorder %s16, 2
      // Predicated region
      $region17: #{tpu_custom_call.1} parent=5 // pred_check
        %p160 = pneg %p159
      $region18: #{tpu_custom_call.1} parent=5 // pred_check_branch
        %162 = sbr.rel (%p160) target = $region20
      $region19: #{tpu_custom_call.1} parent=5 // pred_region
        // Predicated region
        $region21: #{tpu_custom_call.1} parent=19 // pred_check
          %p163 = pneg %p71
        $region22: #{tpu_custom_call.1} parent=19 // pred_check_branch
          %165 = sbr.rel (%p163) target = $region24
        $region23: #{tpu_custom_call.1} parent=19 // pred_region
          %s166 = sand.u32 %s16, 1
          %s167 = scalar_lea.sflag [#allocation7], %s166
          %s168 = sand.u32 %s61, 1
          %s169 = smul.addr %s168, 128
          %s170 = scalar_lea.vmem [#allocation6], %s169
          %s171 = smul.u32 8, %s24
          %s173 = ssub.s32 2048, 2048
          %174 = vsyncadd %s167, %s173
          %s175 = smul.addr %s171, 2
          %s176 = sadd.s32 %s23, %s175
          %s177 = smul.addr %s176, 128
          %s178 = scalar_lea.hbm %s1, %s177
          %s179 = sshll.u32 %s170, 4
          %s180 = int_to_ptr.vmem [resolvable:$true] %s179
          %185 = dma.hbm_to_vmem [thread:$0]  %s178, 2048, %s180, %s167, 256, 128, 8
        $region24: #{tpu_custom_call.1} parent=19 // pred_fallthru
          _
        // Predicated region
        $region25: #{tpu_custom_call.1} parent=19 // pred_check
          %p186 = pneg %p97
        $region26: #{tpu_custom_call.1} parent=19 // pred_check_branch
          %188 = sbr.rel (%p186) target = $region28
        $region27: #{tpu_custom_call.1} parent=19 // pred_region
          %s189 = sand.u32 %s16, 1
          %s190 = scalar_lea.sflag [#allocation7], %s189
          %s191 = sand.u32 %s87, 1
          %s192 = smul.addr %s191, 4
          %s193 = scalar_lea.vmem [#allocation8], %s192
          %s195 = ssub.s32 64, 64
          %196 = vsyncadd %s190, %s195
          %s197 = smul.addr %s23, 32
          %s198 = scalar_lea.hbm %s2, %s197
          %s199 = sshll.u32 %s193, 4
          %s200 = int_to_ptr.vmem [resolvable:$true] %s199
          %205 = dma.hbm_to_vmem [thread:$0]  %s198, 64, %s200, %s190, 64, 32, 2
        $region28: #{tpu_custom_call.1} parent=19 // pred_fallthru
          _
      $region20: #{tpu_custom_call.1} parent=5 // pred_fallthru
        _
      %p206 = scmp.le.s32.totalorder 1, %s16
      %p207 = scmp.lt.s32.totalorder %s16, 3
      %p208 = pnand %p206, %p207
      %p209 = pneg %p208
      // Predicated region
      $region29: #{tpu_custom_call.1} parent=5 // pred_check
        _
      $region30: #{tpu_custom_call.1} parent=5 // pred_check_branch
        %211 = sbr.rel (%p208) target = $region32
      $region31: #{tpu_custom_call.1} parent=5 // pred_region
        %s212 = ssub.s32 %s16, 1
        // Predicated region
        $region33: #{tpu_custom_call.1} parent=31 // pred_check
          %p213 = pneg %p49
        $region34: #{tpu_custom_call.1} parent=31 // pred_check_branch
          %215 = sbr.rel (%p213) target = $region36
        $region35: #{tpu_custom_call.1} parent=31 // pred_region
          %216 = dma.done [#allocation4], 1024
        $region36: #{tpu_custom_call.1} parent=31 // pred_fallthru
          _
        %s217 = sand.u32 %s21, 1
        %s218 = scalar_lea.sflag [#allocation7], %s217
        %s219 = sand.u32 %s64, 1
        %s220 = smul.addr %s219, 128
        %s221 = scalar_lea.vmem [#allocation6], %s220
        // Predicated region
        $region37: #{tpu_custom_call.1} parent=31 // pred_check
          %p222 = pneg %p77
        $region38: #{tpu_custom_call.1} parent=31 // pred_check_branch
          %224 = sbr.rel (%p222) target = $region40
        $region39: #{tpu_custom_call.1} parent=31 // pred_region
          %225 = dma.done %s218, 2048
        $region40: #{tpu_custom_call.1} parent=31 // pred_fallthru
          _
        %s226 = sand.u32 %s21, 1
        %s227 = scalar_lea.sflag [#allocation7], %s226
        %s228 = sand.u32 %s90, 1
        %s229 = smul.addr %s228, 4
        %s230 = scalar_lea.vmem [#allocation8], %s229
        // Predicated region
        $region41: #{tpu_custom_call.1} parent=31 // pred_check
          %p231 = pneg %p103
        $region42: #{tpu_custom_call.1} parent=31 // pred_check_branch
          %233 = sbr.rel (%p231) target = $region44
        $region43: #{tpu_custom_call.1} parent=31 // pred_region
          %234 = dma.done %s227, 64
        $region44: #{tpu_custom_call.1} parent=31 // pred_fallthru
          _
        %p235 = pneg %p49
        %p236 = pneg %p46
        %s237 = sand.u32 %s21, 1
        %s238 = scalar_lea.sflag [#allocation7], %s237
        %s239 = sand.u32 %s64, 1
        %s240 = smul.addr %s239, 128
        %s241 = scalar_lea.vmem [#allocation6], %s240
        %p242 = pneg %p77
        %p243 = pneg %p74
        %s244 = sand.u32 %s21, 1
        %s245 = scalar_lea.sflag [#allocation7], %s244
        %s246 = sand.u32 %s90, 1
        %s247 = smul.addr %s246, 4
        %s248 = scalar_lea.vmem [#allocation8], %s247
        %p249 = pneg %p103
        %p250 = pneg %p100
        %p251 = pneg %p131
        %p252 = pneg %p128
        %s253 = sand.u32 %s118, 1
        %s254 = scalar_lea.sflag [#allocation5], %s253
        %s255 = sand.u32 %s118, 1
        %s256 = smul.addr %s255, 128
        %s257 = scalar_lea.vmem [#allocation9], %s256
        %s258 = smul.u32 8, %s26
        %s259 = smul.u32 8, %s26
        %p260 = scmp.eq.s32.totalorder %s26, 0
        // Predicated region
        $region45: #{tpu_custom_call.1} parent=31 // pred_check
          %p261 = pneg %p260
        $region46: #{tpu_custom_call.1} parent=31 // pred_check_branch
          %263 = sbr.rel (%p261) target = $region48
        $region47: #{tpu_custom_call.1} parent=31 // pred_region
          %264 = vst [vmem:[#allocation2] sm:$0x1] 0.0
          %265 = vst [vmem:[#allocation2 + $0x1] sm:$0x1] 0.0
        $region48: #{tpu_custom_call.1} parent=31 // pred_fallthru
          _
        %v266 = vlaneseq
        %v267 = vshrl.u32 %v266, 7
        %v268 = vadd.s32 %v267, 8
        %v269 = vadd.s32 %v267, 16
        %v270 = vadd.s32 %v267, 24
        %v271 = vadd.s32 %v267, 32
        %v272 = vadd.s32 %v267, 40
        %v273 = vadd.s32 %v267, 48
        %v274 = vadd.s32 %v267, 56
        %s275 = smul.u32 %s26, 64
        %v276 = vstv %s275
        %v277 = vadd.s32 %v267, %v276
        %v278 = vadd.s32 %v268, %v276
        %v279 = vadd.s32 %v269, %v276
        %v280 = vadd.s32 %v270, %v276
        %v281 = vadd.s32 %v271, %v276
        %v282 = vadd.s32 %v272, %v276
        %v283 = vadd.s32 %v273, %v276
        %v284 = vadd.s32 %v274, %v276
        %vm285 = vcmp.gt.s32.totalorder %v277, 0
        %vm286 = vcmp.gt.s32.totalorder %v278, 0
        %vm287 = vcmp.gt.s32.totalorder %v279, 0
        %vm288 = vcmp.gt.s32.totalorder %v280, 0
        %vm289 = vcmp.gt.s32.totalorder %v281, 0
        %vm290 = vcmp.gt.s32.totalorder %v282, 0
        %vm291 = vcmp.gt.s32.totalorder %v283, 0
        %vm292 = vcmp.gt.s32.totalorder %v284, 0
        %v293 = vsel %vm285, 1, 0
        %v294 = vsel %vm286, 1, 0
        %v295 = vsel %vm287, 1, 0
        %v296 = vsel %vm288, 1, 0
        %v297 = vsel %vm289, 1, 0
        %v298 = vsel %vm290, 1, 0
        %v299 = vsel %vm291, 1, 0
        %v300 = vsel %vm292, 1, 0
        %v301 = vcvt.s32.f32 %v293
        %v302 = vcvt.s32.f32 %v294
        %v303 = vcvt.s32.f32 %v295
        %v304 = vcvt.s32.f32 %v296
        %v305 = vcvt.s32.f32 %v297
        %v306 = vcvt.s32.f32 %v298
        %v307 = vcvt.s32.f32 %v299
        %v308 = vcvt.s32.f32 %v300
        %v309 = vld [vmem:[#allocation3] sm:$0xff]
        %v310 = vld [vmem:[#allocation3 + $0x8] sm:$0xff]
        %v311 = vld [vmem:[#allocation3 + $0x10] sm:$0xff]
        %v312 = vld [vmem:[#allocation3 + $0x18] sm:$0xff]
        %v313 = vld [vmem:[#allocation3 + $0x20] sm:$0xff]
        %v314 = vld [vmem:[#allocation3 + $0x28] sm:$0xff]
        %v315 = vld [vmem:[#allocation3 + $0x30] sm:$0xff]
        %v316 = vld [vmem:[#allocation3 + $0x38] sm:$0xff]
        %v317 = vld [vmem:[%s230] sm:$0x3]
        %v318 = vld [vmem:[%s230 + $0x2] sm:$0x3]
        %v319 = vld [vmem:[%s221] sm:$0xff]
        %v320 = vld [vmem:[%s221 + $0x8] sm:$0xff]
        %v321 = vld [vmem:[%s221 + $0x10] sm:$0xff]
        %v322 = vld [vmem:[%s221 + $0x18] sm:$0xff]
        %v323 = vld [vmem:[%s221 + $0x20] sm:$0xff]
        %v324 = vld [vmem:[%s221 + $0x28] sm:$0xff]
        %v325 = vld [vmem:[%s221 + $0x30] sm:$0xff]
        %v326 = vld [vmem:[%s221 + $0x38] sm:$0xff]
        %v327 = vmul.f32 %v319, %v301
        %v328 = vmul.f32 %v320, %v302
        %v329 = vmul.f32 %v321, %v303
        %v330 = vmul.f32 %v322, %v304
        %v331 = vmul.f32 %v323, %v305
        %v332 = vmul.f32 %v324, %v306
        %v333 = vmul.f32 %v325, %v307
        %v334 = vmul.f32 %v326, %v308
        %s335 = scalar_lea.vmem %s221, 64 [#allocation6]
        %v336 = vld [vmem:[%s335] sm:$0xff]
        %v337 = vld [vmem:[%s335 + $0x8] sm:$0xff]
        %v338 = vld [vmem:[%s335 + $0x10] sm:$0xff]
        %v339 = vld [vmem:[%s335 + $0x18] sm:$0xff]
        %v340 = vld [vmem:[%s335 + $0x20] sm:$0xff]
        %v341 = vld [vmem:[%s335 + $0x28] sm:$0xff]
        %v342 = vld [vmem:[%s335 + $0x30] sm:$0xff]
        %v343 = vld [vmem:[%s335 + $0x38] sm:$0xff]
        %v344 = vmul.f32 %v336, %v301
        %v345 = vmul.f32 %v337, %v302
        %v346 = vmul.f32 %v338, %v303
        %v347 = vmul.f32 %v339, %v304
        %v348 = vmul.f32 %v340, %v305
        %v349 = vmul.f32 %v341, %v306
        %v350 = vmul.f32 %v342, %v307
        %v351 = vmul.f32 %v343, %v308
        %v352 = vlaneseq
        %v353 = vshrl.u32 %v352, 7
        %v354 = vsub.s32 0, %v353
        %v355 = vrot.slane %v317, %v354
        %v356 = vmul.f32 %v327, %v355
        %v357 = vmul.f32 %v328, %v355
        %v358 = vmul.f32 %v329, %v355
        %v359 = vmul.f32 %v330, %v355
        %v360 = vmul.f32 %v331, %v355
        %v361 = vmul.f32 %v332, %v355
        %v362 = vmul.f32 %v333, %v355
        %v363 = vmul.f32 %v334, %v355
        %v364 = vlaneseq
        %v365 = vshrl.u32 %v364, 7
        %v366 = vsub.s32 0, %v365
        %v367 = vrot.slane %v318, %v366
        %v368 = vmul.f32 %v344, %v367
        %v369 = vmul.f32 %v345, %v367
        %v370 = vmul.f32 %v346, %v367
        %v371 = vmul.f32 %v347, %v367
        %v372 = vmul.f32 %v348, %v367
        %v373 = vmul.f32 %v349, %v367
        %v374 = vmul.f32 %v350, %v367
        %v375 = vmul.f32 %v351, %v367
        %v376 = vadd.f32 %v356, %v368
        %v377 = vadd.f32 %v357, %v369
        %v378 = vadd.f32 %v358, %v370
        %v379 = vadd.f32 %v359, %v371
        %v380 = vadd.f32 %v360, %v372
        %v381 = vadd.f32 %v361, %v373
        %v382 = vadd.f32 %v362, %v374
        %v383 = vadd.f32 %v363, %v375
        %v384 = vld [vmem:[#allocation2] sm:$0x1]
        %v386 = vlaneseq
        %v387 = vshrl.u32 %v386, 7
        %v388 = vsub.s32 0, %v387
        %v389 = vrot.slane %v384, %v388
        %vm391 = vcmask 523264
        %v393 = vsel %vm391, %v309, 0
        %v396 = vsel %vm391, %v310, 0
        %v399 = vsel %vm391, %v311, 0
        %v402 = vsel %vm391, %v312, 0
        %v405 = vsel %vm391, %v313, 0
        %v408 = vsel %vm391, %v314, 0
        %v411 = vsel %vm391, %v315, 0
        %v414 = vsel %vm391, %v316, 0
        %416 = vmatprep.subr.mxu0 0.0
        %417 = vmatpush1.msra.mxu0 %v376
        %418 = vmatprep.subr.mxu0 0.0
        %419 = vmatpush1.msra.mxu0 %v377
        %420 = vmatprep.subr.mxu0 0.0
        %421 = vmatpush1.msra.mxu0 %v378
        %422 = vmatprep.subr.mxu0 0.0
        %423 = vmatpush1.msra.mxu0 %v379
        %424 = vmatprep.subr.mxu0 0.0
        %425 = vmatpush1.msra.mxu0 %v380
        %426 = vmatprep.subr.mxu0 0.0
        %427 = vmatpush1.msra.mxu0 %v381
        %428 = vmatprep.subr.mxu0 0.0
        %429 = vmatpush1.msra.mxu0 %v382
        %430 = vmatprep.subr.mxu0 0.0
        %431 = vmatpush1.msra.mxu0 %v383
        %432 = vmatprep.subr.mxu0 0.0
        %433 = vmatpush1.msra.mxu0 0.0
        %434 = vmatprep.subr.mxu0 0.0
        %435 = vmatpush1.msra.mxu0 0.0
        %436 = vmatprep.subr.mxu0 0.0
        %437 = vmatpush1.msra.mxu0 0.0
        %438 = vmatprep.subr.mxu0 0.0
        %439 = vmatpush1.msra.mxu0 0.0
        %440 = vmatprep.subr.mxu0 0.0
        %441 = vmatpush1.msra.mxu0 0.0
        %442 = vmatprep.subr.mxu0 0.0
        %443 = vmatpush1.msra.mxu0 0.0
        %444 = vmatprep.subr.mxu0 0.0
        %445 = vmatpush1.msra.mxu0 0.0
        %446 = vmatprep.subr.mxu0 0.0
        %447 = vmatpush1.msra.mxu0 0.0
        %448 = vmatprep.subr.mxu0 0.0
        %449 = vmatpush1.msra.mxu0 0.0
        %450 = vmatprep.subr.mxu0 0.0
        %451 = vmatpush1.msra.mxu0 0.0
        %452 = vmatprep.subr.mxu0 0.0
        %453 = vmatpush1.msra.mxu0 0.0
        %454 = vmatprep.subr.mxu0 0.0
        %455 = vmatpush1.msra.mxu0 0.0
        %456 = vmatprep.subr.mxu0 0.0
        %457 = vmatpush1.msra.mxu0 0.0
        %458 = vmatprep.subr.mxu0 0.0
        %459 = vmatpush1.msra.mxu0 0.0
        %460 = vmatprep.subr.mxu0 0.0
        %461 = vmatpush1.msra.mxu0 0.0
        %462 = vmatprep.subr.mxu0 0.0
        %463 = vmatpush1.msra.mxu0 0.0
        %464 = vmatprep.subr.mxu0 0.0
        %465 = vmatpush1.msra.mxu0 0.0
        %466 = vmatprep.subr.mxu0 0.0
        %467 = vmatpush1.msra.mxu0 0.0
        %468 = vmatprep.subr.mxu0 0.0
        %469 = vmatpush1.msra.mxu0 0.0
        %470 = vmatprep.subr.mxu0 0.0
        %471 = vmatpush1.msra.mxu0 0.0
        %472 = vmatprep.subr.mxu0 0.0
        %473 = vmatpush1.msra.mxu0 0.0
        %474 = vmatprep.subr.mxu0 0.0
        %475 = vmatpush1.msra.mxu0 0.0
        %476 = vmatprep.subr.mxu0 0.0
        %477 = vmatpush1.msra.mxu0 0.0
        %478 = vmatprep.subr.mxu0 0.0
        %479 = vmatpush1.msra.mxu0 0.0
        %480 = vmatprep.mubr.f32.mxu0 0.0
        %481 = vmatmul.mubr.f32.gmra.mrb[0].mxu0 %v393
        %v482 = vpop.f32.mrb[0].mxu0
        %v483 = vadd.f32 %v389, %v482
        %v484 = vpop.f32.mrb[0].mxu0
        %485 = vmatprep.mubr.f32.mxu0 0.0
        %486 = vmatmul.mubr.f32.gmra.mrb[0].mxu0 %v396
        %v487 = vpop.f32.mrb[0].mxu0
        %v488 = vadd.f32 %v389, %v487
        %v489 = vpop.f32.mrb[0].mxu0
        %490 = vmatprep.mubr.f32.mxu0 0.0
        %491 = vmatmul.mubr.f32.gmra.mrb[0].mxu0 %v399
        %v492 = vpop.f32.mrb[0].mxu0
        %v493 = vadd.f32 %v389, %v492
        %v494 = vpop.f32.mrb[0].mxu0
        %495 = vmatprep.mubr.f32.mxu0 0.0
        %496 = vmatmul.mubr.f32.gmra.mrb[0].mxu0 %v402
        %v497 = vpop.f32.mrb[0].mxu0
        %v498 = vadd.f32 %v389, %v497
        %v499 = vpop.f32.mrb[0].mxu0
        %500 = vmatprep.mubr.f32.mxu0 0.0
        %501 = vmatmul.mubr.f32.gmra.mrb[0].mxu0 %v405
        %v502 = vpop.f32.mrb[0].mxu0
        %v503 = vadd.f32 %v389, %v502
        %v504 = vpop.f32.mrb[0].mxu0
        %505 = vmatprep.mubr.f32.mxu0 0.0
        %506 = vmatmul.mubr.f32.gmra.mrb[0].mxu0 %v408
        %v507 = vpop.f32.mrb[0].mxu0
        %v508 = vadd.f32 %v389, %v507
        %v509 = vpop.f32.mrb[0].mxu0
        %510 = vmatprep.mubr.f32.mxu0 0.0
        %511 = vmatmul.mubr.f32.gmra.mrb[0].mxu0 %v411
        %v512 = vpop.f32.mrb[0].mxu0
        %v513 = vadd.f32 %v389, %v512
        %v514 = vpop.f32.mrb[0].mxu0
        %515 = vmatprep.mubr.f32.mxu0 0.0
        %516 = vmatmul.mubr.f32.gmra.mrb[0].mxu0 %v414
        %v517 = vpop.f32.mrb[0].mxu0
        %v518 = vadd.f32 %v389, %v517
        %v519 = vpop.f32.mrb[0].mxu0
        %520 = vdwg.mxu0
        %521 = vst [vmem:[%s257] sm:$0xff] %v483
        %522 = vst [vmem:[%s257 + $0x8] sm:$0xff] %v488
        %523 = vst [vmem:[%s257 + $0x10] sm:$0xff] %v493
        %524 = vst [vmem:[%s257 + $0x18] sm:$0xff] %v498
        %525 = vst [vmem:[%s257 + $0x20] sm:$0xff] %v503
        %526 = vst [vmem:[%s257 + $0x28] sm:$0xff] %v508
        %527 = vst [vmem:[%s257 + $0x30] sm:$0xff] %v513
        %528 = vst [vmem:[%s257 + $0x38] sm:$0xff] %v518
        %529 = vst [vmem:[#allocation2 - $0x7] sm:$0x80] %v518
        %v530 = vlaneseq
        %v531 = vshrl.u32 %v530, 7
        %v532 = vsub.s32 1, %v531
        %v533 = vrot.slane %v317, %v532
        %v534 = vmul.f32 %v327, %v533
        %v535 = vmul.f32 %v328, %v533
        %v536 = vmul.f32 %v329, %v533
        %v537 = vmul.f32 %v330, %v533
        %v538 = vmul.f32 %v331, %v533
        %v539 = vmul.f32 %v332, %v533
        %v540 = vmul.f32 %v333, %v533
        %v541 = vmul.f32 %v334, %v533
        %v542 = vlaneseq
        %v543 = vshrl.u32 %v542, 7
        %v544 = vsub.s32 1, %v543
        %v545 = vrot.slane %v318, %v544
        %v546 = vmul.f32 %v344, %v545
        %v547 = vmul.f32 %v345, %v545
        %v548 = vmul.f32 %v346, %v545
        %v549 = vmul.f32 %v347, %v545
        %v550 = vmul.f32 %v348, %v545
        %v551 = vmul.f32 %v349, %v545
        %v552 = vmul.f32 %v350, %v545
        %v553 = vmul.f32 %v351, %v545
        %v554 = vadd.f32 %v534, %v546
        %v555 = vadd.f32 %v535, %v547
        %v556 = vadd.f32 %v536, %v548
        %v557 = vadd.f32 %v537, %v549
        %v558 = vadd.f32 %v538, %v550
        %v559 = vadd.f32 %v539, %v551
        %v560 = vadd.f32 %v540, %v552
        %v561 = vadd.f32 %v541, %v553
        %s562 = scalar_lea.vmem [#allocation2], 1
        %v563 = vld [vmem:[%s562] sm:$0x1]
        %v565 = vlaneseq
        %v566 = vshrl.u32 %v565, 7
        %v567 = vsub.s32 0, %v566
        %v568 = vrot.slane %v563, %v567
        %570 = vmatprep.subr.mxu0 0.0
        %571 = vmatpush1.msra.mxu0 %v554
        %572 = vmatprep.subr.mxu0 0.0
        %573 = vmatpush1.msra.mxu0 %v555
        %574 = vmatprep.subr.mxu0 0.0
        %575 = vmatpush1.msra.mxu0 %v556
        %576 = vmatprep.subr.mxu0 0.0
        %577 = vmatpush1.msra.mxu0 %v557
        %578 = vmatprep.subr.mxu0 0.0
        %579 = vmatpush1.msra.mxu0 %v558
        %580 = vmatprep.subr.mxu0 0.0
        %581 = vmatpush1.msra.mxu0 %v559
        %582 = vmatprep.subr.mxu0 0.0
        %583 = vmatpush1.msra.mxu0 %v560
        %584 = vmatprep.subr.mxu0 0.0
        %585 = vmatpush1.msra.mxu0 %v561
        %586 = vmatprep.subr.mxu0 0.0
        %587 = vmatpush1.msra.mxu0 0.0
        %588 = vmatprep.subr.mxu0 0.0
        %589 = vmatpush1.msra.mxu0 0.0
        %590 = vmatprep.subr.mxu0 0.0
        %591 = vmatpush1.msra.mxu0 0.0
        %592 = vmatprep.subr.mxu0 0.0
        %593 = vmatpush1.msra.mxu0 0.0
        %594 = vmatprep.subr.mxu0 0.0
        %595 = vmatpush1.msra.mxu0 0.0
        %596 = vmatprep.subr.mxu0 0.0
        %597 = vmatpush1.msra.mxu0 0.0
        %598 = vmatprep.subr.mxu0 0.0
        %599 = vmatpush1.msra.mxu0 0.0
        %600 = vmatprep.subr.mxu0 0.0
        %601 = vmatpush1.msra.mxu0 0.0
        %602 = vmatprep.subr.mxu0 0.0
        %603 = vmatpush1.msra.mxu0 0.0
        %604 = vmatprep.subr.mxu0 0.0
        %605 = vmatpush1.msra.mxu0 0.0
        %606 = vmatprep.subr.mxu0 0.0
        %607 = vmatpush1.msra.mxu0 0.0
        %608 = vmatprep.subr.mxu0 0.0
        %609 = vmatpush1.msra.mxu0 0.0
        %610 = vmatprep.subr.mxu0 0.0
        %611 = vmatpush1.msra.mxu0 0.0
        %612 = vmatprep.subr.mxu0 0.0
        %613 = vmatpush1.msra.mxu0 0.0
        %614 = vmatprep.subr.mxu0 0.0
        %615 = vmatpush1.msra.mxu0 0.0
        %616 = vmatprep.subr.mxu0 0.0
        %617 = vmatpush1.msra.mxu0 0.0
        %618 = vmatprep.subr.mxu0 0.0
        %619 = vmatpush1.msra.mxu0 0.0
        %620 = vmatprep.subr.mxu0 0.0
        %621 = vmatpush1.msra.mxu0 0.0
        %622 = vmatprep.subr.mxu0 0.0
        %623 = vmatpush1.msra.mxu0 0.0
        %624 = vmatprep.subr.mxu0 0.0
        %625 = vmatpush1.msra.mxu0 0.0
        %626 = vmatprep.subr.mxu0 0.0
        %627 = vmatpush1.msra.mxu0 0.0
        %628 = vmatprep.subr.mxu0 0.0
        %629 = vmatpush1.msra.mxu0 0.0
        %630 = vmatprep.subr.mxu0 0.0
        %631 = vmatpush1.msra.mxu0 0.0
        %632 = vmatprep.subr.mxu0 0.0
        %633 = vmatpush1.msra.mxu0 0.0
        %634 = vmatprep.mubr.f32.mxu0 0.0
        %635 = vmatmul.mubr.f32.gmra.mrb[0].mxu0 %v393
        %v636 = vpop.f32.mrb[0].mxu0
        %v637 = vadd.f32 %v568, %v636
        %v638 = vpop.f32.mrb[0].mxu0
        %639 = vmatprep.mubr.f32.mxu0 0.0
        %640 = vmatmul.mubr.f32.gmra.mrb[0].mxu0 %v396
        %v641 = vpop.f32.mrb[0].mxu0
        %v642 = vadd.f32 %v568, %v641
        %v643 = vpop.f32.mrb[0].mxu0
        %644 = vmatprep.mubr.f32.mxu0 0.0
        %645 = vmatmul.mubr.f32.gmra.mrb[0].mxu0 %v399
        %v646 = vpop.f32.mrb[0].mxu0
        %v647 = vadd.f32 %v568, %v646
        %v648 = vpop.f32.mrb[0].mxu0
        %649 = vmatprep.mubr.f32.mxu0 0.0
        %650 = vmatmul.mubr.f32.gmra.mrb[0].mxu0 %v402
        %v651 = vpop.f32.mrb[0].mxu0
        %v652 = vadd.f32 %v568, %v651
        %v653 = vpop.f32.mrb[0].mxu0
        %654 = vmatprep.mubr.f32.mxu0 0.0
        %655 = vmatmul.mubr.f32.gmra.mrb[0].mxu0 %v405
        %v656 = vpop.f32.mrb[0].mxu0
        %v657 = vadd.f32 %v568, %v656
        %v658 = vpop.f32.mrb[0].mxu0
        %659 = vmatprep.mubr.f32.mxu0 0.0
        %660 = vmatmul.mubr.f32.gmra.mrb[0].mxu0 %v408
        %v661 = vpop.f32.mrb[0].mxu0
        %v662 = vadd.f32 %v568, %v661
        %v663 = vpop.f32.mrb[0].mxu0
        %664 = vmatprep.mubr.f32.mxu0 0.0
        %665 = vmatmul.mubr.f32.gmra.mrb[0].mxu0 %v411
        %v666 = vpop.f32.mrb[0].mxu0
        %v667 = vadd.f32 %v568, %v666
        %v668 = vpop.f32.mrb[0].mxu0
        %669 = vmatprep.mubr.f32.mxu0 0.0
        %670 = vmatmul.mubr.f32.gmra.mrb[0].mxu0 %v414
        %v671 = vpop.f32.mrb[0].mxu0
        %v672 = vadd.f32 %v568, %v671
        %v673 = vpop.f32.mrb[0].mxu0
        %674 = vdwg.mxu0
        %s675 = scalar_lea.vmem %s257, 64 [#allocation9]
        %676 = vst [vmem:[%s675] sm:$0xff] %v637
        %677 = vst [vmem:[%s675 + $0x8] sm:$0xff] %v642
        %678 = vst [vmem:[%s675 + $0x10] sm:$0xff] %v647
        %679 = vst [vmem:[%s675 + $0x18] sm:$0xff] %v652
        %680 = vst [vmem:[%s675 + $0x20] sm:$0xff] %v657
        %681 = vst [vmem:[%s675 + $0x28] sm:$0xff] %v662
        %682 = vst [vmem:[%s675 + $0x30] sm:$0xff] %v667
        %683 = vst [vmem:[%s675 + $0x38] sm:$0xff] %v672
        %684 = vst [vmem:[%s562 - $0x7] sm:$0x80] %v672
        %s685 = sand.u32 %s118, 1
        %s686 = scalar_lea.sflag [#allocation5], %s685
        %s687 = sand.u32 %s118, 1
        %s688 = smul.addr %s687, 128
        %s689 = scalar_lea.vmem [#allocation9], %s688
        // Predicated region
        $region49: #{tpu_custom_call.1} parent=31 // pred_check
          %p690 = pneg %p128
        $region50: #{tpu_custom_call.1} parent=31 // pred_check_branch
          %692 = sbr.rel (%p690) target = $region52
        $region51: #{tpu_custom_call.1} parent=31 // pred_region
          %s693 = smul.u32 8, %s26
          %s695 = ssub.s32 2048, 2048
          %696 = vsyncadd %s686, %s695
          %s697 = smul.addr %s693, 2
          %s698 = sadd.s32 %s25, %s697
          %s699 = smul.addr %s698, 128
          %s700 = scalar_lea.hbm %s3, %s699
          %s701 = sshll.u32 %s689, 4
          %s702 = int_to_ptr.vmem [resolvable:$true] %s701
          %707 = dma.vmem_to_hbm [thread:$0]  %s702, 2048, %s700, %s686, 128, 256, 8
        $region52: #{tpu_custom_call.1} parent=31 // pred_fallthru
          _
      $region32: #{tpu_custom_call.1} parent=5 // pred_fallthru
        _
      %p708 = scmp.le.s32.totalorder 2, %s16
      // Predicated region
      $region53: #{tpu_custom_call.1} parent=5 // pred_check
        %p709 = pneg %p708
      $region54: #{tpu_custom_call.1} parent=5 // pred_check_branch
        %711 = sbr.rel (%p709) target = $region56
      $region55: #{tpu_custom_call.1} parent=5 // pred_region
        %s712 = ssub.s32 %s16, 2
        // Predicated region
        $region57: #{tpu_custom_call.1} parent=55 // pred_check
          %p713 = pneg %p134
        $region58: #{tpu_custom_call.1} parent=55 // pred_check_branch
          %715 = sbr.rel (%p713) target = $region60
        $region59: #{tpu_custom_call.1} parent=55 // pred_region
          %s716 = sand.u32 %s119, 1
          %s717 = scalar_lea.sflag [#allocation5], %s716
          %s718 = sand.u32 %s119, 1
          %s719 = smul.addr %s718, 128
          %s720 = scalar_lea.vmem [#allocation9], %s719
          %721 = dma.done %s717, 2048
        $region60: #{tpu_custom_call.1} parent=55 // pred_fallthru
          _
      $region56: #{tpu_custom_call.1} parent=5 // pred_fallthru
        _
    $region6: #{tpu_custom_call.1} parent=1 // loop_footer
      %s20 = sadd.s32 1, %s16
    $region7: #{tpu_custom_call.1} parent=1 // loop_footer_branch
      %15 = sbr.rel target = $region3
    $region8: #{tpu_custom_call.1} parent=1 // loop_exit
      _
    %722 = vsyncpa [#allocation4], 1
    %s723 = scalar_lea.sflag [#allocation4], 1
    %724 = vsyncpa %s723, 1
    %725 = vsyncpa [#allocation7], 1
    %s726 = scalar_lea.sflag [#allocation7], 1
    %727 = vsyncpa %s726, 1
    %728 = vsyncpa [#allocation5], 1
    %s729 = scalar_lea.sflag [#allocation5], 1
    %730 = vsyncpa %s729, 1

</llo_original>
